<compile_context>
chip_gen: v7x
topology: tpu7x:2x2x1
jax: 0.10.0
libtpu: 0.0.40
codegen_flags: <defaults>
</compile_context>

<pallas_src>
import functools

import jax
import jax.numpy as jnp
from jax.experimental import pallas as pl
from jax.experimental.pallas import tpu as pltpu

FEATURE_BITS = (8, 6)   # (word length, fraction length)
RESULT_BITS = (8, 6)
DEGREE = 4              # encoding_config['nested'][0]['degree']
S_BLOCK_MAX = 1024      # 1024 sublanes * 128 lanes = 131072 points per grid step


def _round_up(a, b):
    return ((a + b - 1) // b) * b


def _fpq(v, wl, fl):
    """Fixed point quantize (array): wl total bits, fl fraction bits, saturating."""
    scale = 2.0 ** fl
    qmax = 2.0 ** (wl - 1) - 1.0
    qmin = -(2.0 ** (wl - 1))
    return jnp.clip(jnp.round(v * scale), qmin, qmax) * (1.0 / scale)


def _fpq_const(v, wl, fl):
    """Fixed point quantize a Python scalar at trace time (no runtime ops)."""
    scale = 2.0 ** fl
    q = round(v * scale)  # round-half-even, same as jnp.round
    q = max(min(q, 2 ** (wl - 1) - 1), -(2 ** (wl - 1)))
    return float(q) / scale


def _qsh_kernel(in_ref, out_ref, *, degree, fbits, rbits):
    """in_ref: (3, S, 128) f32 VMEM tile; out_ref: (16, S, 128) VMEM tile (bf16/f32).

    All arithmetic is done on integer-valued "codes" (value * 2^FF) in f32, with the
    quantizer scales folded into trace-time constants.  Every intermediate stays exactly
    representable in f32 (numerators < 2^24), so results are bit-exact vs. the
    unfactored fq/rq chain of the PyTorch module.
    """
    FW, FF = fbits
    RW, RF = rbits
    f_scale = float(2 ** FF)
    inv_f = float(2.0 ** (-FF))
    inv_f2 = float(2.0 ** (-2 * FF))
    fq_max = float(2 ** (FW - 1) - 1)
    fq_min = float(-(2 ** (FW - 1)))
    rq_max = float(2 ** (RW - 1) - 1)
    rq_min = float(-(2 ** (RW - 1)))
    r_descale = float(2.0 ** (-RF))
    odt = out_ref.dtype

    def cconst(c):
        # Module: Fixed_Point_Quantize(const, FeatureBits[0], ResultBits[1]) -> integer code.
        q = round(c * (2 ** RF))
        q = max(min(q, 2 ** (FW - 1) - 1), -(2 ** (FW - 1)))
        return float(q)

    def fclip(v):
        return jnp.clip(v, fq_min, fq_max)

    def fcode(v_scaled):
        # round + saturate a (value * 2^FF) slab to a feature-format integer code
        return fclip(jnp.round(v_scaled))

    def store_row(i, v_scaled):
        # result-quantize a (value * 2^RF) slab and store
        q = jnp.clip(jnp.round(v_scaled), rq_min, rq_max)
        out_ref[i] = (q * r_descale).astype(odt)

    def store_zero(i):
        out_ref[i] = jnp.zeros(out_ref.shape[1:], dtype=odt)

    # feature codes X = sat(round((2*in - 1) * 2^FF))  (computed as in*2^(FF+1) - 2^FF)
    x = fcode(in_ref[0].astype(jnp.float32) * (2.0 * f_scale) - f_scale)
    y = fcode(in_ref[1].astype(jnp.float32) * (2.0 * f_scale) - f_scale)
    z = fcode(in_ref[2].astype(jnp.float32) * (2.0 * f_scale) - f_scale)

    if degree >= 1:
        # row 0 constant uses (ResultBits[0], ResultBits[1]) in the module
        out_ref[0] = jnp.full(x.shape, _fpq_const(0.28209479177387814, RW, RF), dtype=odt)
    else:
        store_zero(0)

    if degree >= 2:
        k1 = cconst(-0.48860251190291987) * inv_f
        k2 = cconst(0.48860251190291987) * inv_f
        store_row(1, k1 * y)
        store_row(2, k2 * z)
        store_row(3, k1 * x)
    else:
        for i in (1, 2, 3):
            store_zero(i)

    if degree >= 3:
        xy = fcode(x * y * inv_f)
        xz = fcode(x * z * inv_f)
        yz = fcode(y * z * inv_f)
        x2 = fcode(x * x * inv_f)
        y2 = fcode(y * y * inv_f)
        z2 = fcode(z * z * inv_f)
        dxy = x2 - y2                       # unclipped, shared by rows 8 and 14
        k4 = cconst(1.0925484305920792) * inv_f
        k5 = cconst(-1.0925484305920792) * inv_f
        k6a = cconst(0.94617469575756) * inv_f
        c6b = cconst(0.31539156525252)
        k8 = cconst(0.5462742152960396) * inv_f
        store_row(4, k4 * xy)
        store_row(5, k5 * yz)
        store_row(6, k6a * z2 - c6b)
        store_row(7, k5 * xz)
        store_row(8, k8 * dxy)
    else:
        for i in range(4, 9):
            store_zero(i)

    if degree >= 4:
        fz5 = 5.0 * z2
        t = fclip(f_scale - fz5)            # code of fq(1 - 5 z^2)   (integer, no round)
        u = fclip(fz5 - 3.0 * f_scale)      # code of fq(5 z^2 - 3)
        w9 = fclip(y2 - 3.0 * x2)           # code of fq(-3 x^2 + y^2)
        w15 = fclip(3.0 * y2 - x2)          # code of fq(-x^2 + 3 y^2)
        d = fclip(dxy)                      # code of fq(x^2 - y^2)
        k9 = cconst(0.5900435899266435) * inv_f2
        k10 = cconst(2.890611442640554) * inv_f2
        k11 = cconst(0.4570457994644657) * inv_f2
        k12 = cconst(0.3731763325901154) * inv_f2
        k14 = cconst(1.445305721320277) * inv_f2
        store_row(9, k9 * y * w9)
        store_row(10, k10 * xy * z)
        store_row(11, k11 * y * t)
        store_row(12, k12 * z * u)
        store_row(13, k11 * x * t)
        store_row(14, k14 * z * d)
        store_row(15, k9 * x * w15)
    else:
        for i in range(9, 16):
            store_zero(i)


def qsh_encoding_lanes(x3d, degree=DEGREE, feature_bits=FEATURE_BITS,
                       result_bits=RESULT_BITS, out_dtype=jnp.bfloat16,
                       s_block=None):
    """Lane-dense entry point: x3d (3, S, 128) float32 -> (16, S, 128) out_dtype.

    Callers that can produce/consume this layout avoid all wrapper transposes.
    out_dtype=jnp.bfloat16 is exact for these quantized values (q/2^RF, |q| <= 2^(RW-1),
    RW <= 9).
    """
    assert x3d.ndim == 3 and x3d.shape[0] == 3 and x3d.shape[2] == 128
    s = x3d.shape[1]
    if s_block is None:
        s_block = s if s <= S_BLOCK_MAX else S_BLOCK_MAX
    assert s % s_block == 0, "S must be a multiple of the block size"
    if jnp.dtype(out_dtype) == jnp.dtype(jnp.bfloat16):
        assert result_bits[0] <= 9, "bf16 output is only bit-exact for RW <= 9"

    kernel = functools.partial(
        _qsh_kernel, degree=degree, fbits=tuple(feature_bits), rbits=tuple(result_bits))

    n_points = s * 128
    out_itemsize = jnp.dtype(out_dtype).itemsize
    cost = pl.CostEstimate(
        flops=170 * n_points,
        transcendentals=0,
        bytes_accessed=n_points * (3 * 4 + 16 * out_itemsize),
    )

    return pl.pallas_call(
        kernel,
        out_shape=jax.ShapeDtypeStruct((16, s, 128), out_dtype),
        grid_spec=pltpu.PrefetchScalarGridSpec(
            num_scalar_prefetch=0,
            grid=(s // s_block,),
            in_specs=[pl.BlockSpec((3, s_block, 128), lambda i: (0, i, 0))],
            out_specs=pl.BlockSpec((16, s_block, 128), lambda i: (0, i, 0)),
        ),
        compiler_params=pltpu.CompilerParams(
            dimension_semantics=("parallel",),
            vmem_limit_bytes=32 * 1024 * 1024,
        ),
        cost_estimate=cost,
    )(x3d)


def qsh_encoding(inputs, degree=DEGREE, feature_bits=FEATURE_BITS, result_bits=RESULT_BITS):
    """Module-compatible interface: inputs (N, 3) float32 in [0,1] -> (N, 16) float32."""
    assert inputs.ndim == 2 and inputs.shape[-1] == 3
    n = inputs.shape[0]
    s_total = max(-(-n // 128), 1)
    # Target >= 4 grid steps on large inputs (v7x 2-TC split + per-step overhead
    # amortization), capped at S_BLOCK_MAX; multiple of 16 sublanes for bf16 tiles.
    s_blk = min(S_BLOCK_MAX, _round_up(max(-(-s_total // 4), 1), 16))
    s_pad = _round_up(s_total, s_blk)
    n_pad = s_pad * 128

    # TODO(synk): these layout passes (pad+transpose in, transpose out) exist only to
    # present the module's (N,3)->(N,16) interface; callers that can produce/consume the
    # lane-dense (3,S,128)/(16,S,128) layout should call qsh_encoding_lanes directly and
    # keep the bf16 output (removes the dominant HBM cost of this wrapper path).
    x_t = jnp.zeros((3, n_pad), jnp.float32).at[:, :n].set(
        jnp.transpose(inputs.astype(jnp.float32)))
    x3d = x_t.reshape(3, s_pad, 128)

    out3d = qsh_encoding_lanes(x3d, degree, feature_bits, result_bits,
                               out_dtype=jnp.bfloat16, s_block=s_blk)
    # transpose in bf16 (half the layout traffic); cast to f32 only at the end (exact).
    return jnp.transpose(out3d.reshape(16, n_pad))[:n, :].astype(jnp.float32)


def qsh_encoding_ref(inputs, degree=DEGREE, feature_bits=FEATURE_BITS, result_bits=RESULT_BITS):
    """Pure-JAX reference mirroring the PyTorch module exactly (incl. redundant quantizes)."""
    FW, FF = feature_bits
    RW, RF = result_bits
    fq = lambda v: _fpq(v, FW, FF)
    rq = lambda v: _fpq(v, RW, RF)
    cq = lambda c: _fpq_const(c, FW, RF)

    inp = inputs.astype(jnp.float32)
    x = fq(inp[:, 0] * 2.0 - 1.0)
    y = fq(inp[:, 1] * 2.0 - 1.0)
    z = fq(inp[:, 2] * 2.0 - 1.0)
    xy = fq(x * y)
    xz = fq(x * z)
    yz = fq(y * z)
    x2 = fq(x * x)
    y2 = fq(y * y)
    z2 = fq(z * z)

    n = inputs.shape[0]
    cols = [jnp.zeros((n,), jnp.float32)] * 16
    if degree >= 1:
        cols[0] = jnp.full((n,), _fpq_const(0.28209479177387814, RW, RF), jnp.float32)
    if degree >= 2:
        cols[1] = rq(cq(-0.48860251190291987) * fq(y))
        cols[2] = rq(cq(0.48860251190291987) * fq(z))
        cols[3] = rq(cq(-0.48860251190291987) * fq(x))
    if degree >= 3:
        cols[4] = rq(cq(1.0925484305920792) * fq(xy))
        cols[5] = rq(cq(-1.0925484305920792) * fq(yz))
        cols[6] = rq(cq(0.94617469575756) * fq(z2) - cq(0.31539156525252))
        cols[7] = rq(cq(-1.0925484305920792) * fq(xz))
        cols[8] = rq(cq(0.5462742152960396) * fq(x2) - cq(0.5462742152960396) * fq(y2))
    if degree >= 4:
        cols[9] = rq(cq(0.5900435899266435) * fq(y) * fq(-3.0 * x2 + y2))
        cols[10] = rq(cq(2.890611442640554) * fq(xy) * fq(z))
        cols[11] = rq(cq(0.4570457994644657) * fq(y) * fq(1.0 - 5.0 * z2))
        cols[12] = rq(cq(0.3731763325901154) * fq(z) * fq(5.0 * z2 - 3.0))
        cols[13] = rq(cq(0.4570457994644657) * fq(x) * fq(1.0 - 5.0 * z2))
        cols[14] = rq(cq(1.445305721320277) * fq(z) * fq(x2 - y2))
        cols[15] = rq(cq(0.5900435899266435) * fq(x) * fq(-x2 + 3.0 * y2))
    return jnp.stack(cols, axis=-1)


if __name__ == "__main__":
    key = jax.random.PRNGKey(0)
    N = 1000  # small, non-multiple of 128 to exercise padding + slicing
    inputs = jax.random.uniform(key, (N, 3), dtype=jnp.float32)

    out = jax.block_until_ready(qsh_encoding(inputs))
    ref = qsh_encoding_ref(inputs)

    assert out.shape == (N, 16) and out.dtype == jnp.float32
    assert jnp.allclose(out, ref, atol=1e-6), "Pallas output mismatch vs reference"

    print("KERNEL_OK")
</pallas_src>

<mosaic_0001>
module attributes {stable_mosaic.version = 11 : i64} {
  func.func @_qsh_kernel(%arg0: i32, %arg1: memref<3x16x128xf32, #tpu.memory_space<vmem>>, %arg2: memref<16x16x128xbf16, #tpu.memory_space<vmem>>) attributes {dimension_semantics = [#tpu.dimension_semantics<parallel>], iteration_bounds = array<i64: 1>, scalar_prefetch = 0 : i64, scratch_operands = 0 : i64, tpu.core_type = #tpu.core_type<tc>, window_params = [{transform_indices = @transform_0, window_bounds = array<i64: 3, 16, 128>}, {transform_indices = @transform_1, window_bounds = array<i64: 16, 16, 128>}]} {
    %c0 = arith.constant 0 : index
    %c0_0 = arith.constant 0 : index
    %c0_1 = arith.constant 0 : index
    %0 = vector.load %arg1[%c0, %c0_0, %c0_1] : memref<3x16x128xf32, #tpu.memory_space<vmem>>, vector<1x16x128xf32>
    %1 = vector.shape_cast %0 : vector<1x16x128xf32> to vector<16x128xf32>
    %cst = arith.constant 1.280000e+02 : f32
    %2 = vector.broadcast %cst : f32 to vector<16x128xf32>
    %3 = arith.mulf %1, %2 : vector<16x128xf32>
    %cst_2 = arith.constant 6.400000e+01 : f32
    %4 = vector.broadcast %cst_2 : f32 to vector<16x128xf32>
    %5 = arith.subf %3, %4 : vector<16x128xf32>
    %6 = math.roundeven %5 : vector<16x128xf32>
    %cst_3 = arith.constant -1.280000e+02 : f32
    %cst_4 = arith.constant 1.270000e+02 : f32
    %7 = vector.broadcast %cst_3 : f32 to vector<16x128xf32>
    %8 = arith.maximumf %7, %6 : vector<16x128xf32>
    %9 = vector.broadcast %cst_4 : f32 to vector<16x128xf32>
    %10 = arith.minimumf %9, %8 : vector<16x128xf32>
    %c1 = arith.constant 1 : index
    %c0_5 = arith.constant 0 : index
    %c0_6 = arith.constant 0 : index
    %11 = vector.load %arg1[%c1, %c0_5, %c0_6] : memref<3x16x128xf32, #tpu.memory_space<vmem>>, vector<1x16x128xf32>
    %12 = vector.shape_cast %11 : vector<1x16x128xf32> to vector<16x128xf32>
    %cst_7 = arith.constant 1.280000e+02 : f32
    %13 = vector.broadcast %cst_7 : f32 to vector<16x128xf32>
    %14 = arith.mulf %12, %13 : vector<16x128xf32>
    %cst_8 = arith.constant 6.400000e+01 : f32
    %15 = vector.broadcast %cst_8 : f32 to vector<16x128xf32>
    %16 = arith.subf %14, %15 : vector<16x128xf32>
    %17 = math.roundeven %16 : vector<16x128xf32>
    %cst_9 = arith.constant -1.280000e+02 : f32
    %cst_10 = arith.constant 1.270000e+02 : f32
    %18 = vector.broadcast %cst_9 : f32 to vector<16x128xf32>
    %19 = arith.maximumf %18, %17 : vector<16x128xf32>
    %20 = vector.broadcast %cst_10 : f32 to vector<16x128xf32>
    %21 = arith.minimumf %20, %19 : vector<16x128xf32>
    %c2 = arith.constant 2 : index
    %c0_11 = arith.constant 0 : index
    %c0_12 = arith.constant 0 : index
    %22 = vector.load %arg1[%c2, %c0_11, %c0_12] : memref<3x16x128xf32, #tpu.memory_space<vmem>>, vector<1x16x128xf32>
    %23 = vector.shape_cast %22 : vector<1x16x128xf32> to vector<16x128xf32>
    %cst_13 = arith.constant 1.280000e+02 : f32
    %24 = vector.broadcast %cst_13 : f32 to vector<16x128xf32>
    %25 = arith.mulf %23, %24 : vector<16x128xf32>
    %cst_14 = arith.constant 6.400000e+01 : f32
    %26 = vector.broadcast %cst_14 : f32 to vector<16x128xf32>
    %27 = arith.subf %25, %26 : vector<16x128xf32>
    %28 = math.roundeven %27 : vector<16x128xf32>
    %cst_15 = arith.constant -1.280000e+02 : f32
    %cst_16 = arith.constant 1.270000e+02 : f32
    %29 = vector.broadcast %cst_15 : f32 to vector<16x128xf32>
    %30 = arith.maximumf %29, %28 : vector<16x128xf32>
    %31 = vector.broadcast %cst_16 : f32 to vector<16x128xf32>
    %32 = arith.minimumf %31, %30 : vector<16x128xf32>
    %cst_17 = arith.constant 2.812500e-01 : bf16
    %33 = vector.broadcast %cst_17 : bf16 to vector<16x128xbf16>
    %c0_18 = arith.constant 0 : index
    %c0_19 = arith.constant 0 : index
    %c0_20 = arith.constant 0 : index
    %34 = vector.load %arg2[%c0_18, %c0_19, %c0_20] : memref<16x16x128xbf16, #tpu.memory_space<vmem>>, vector<1x16x128xbf16>
    %35 = vector.shape_cast %34 : vector<1x16x128xbf16> to vector<16x128xbf16>
    %36 = vector.shape_cast %33 : vector<16x128xbf16> to vector<1x16x128xbf16>
    tpu.vector_store %arg2[%c0_18, %c0_19, %c0_20], %36 {strides = array<i32>} : memref<16x16x128xbf16, #tpu.memory_space<vmem>>, vector<1x16x128xbf16>,
    %cst_21 = arith.constant -4.843750e-01 : f32
    %37 = vector.broadcast %cst_21 : f32 to vector<16x128xf32>
    %38 = arith.mulf %37, %21 : vector<16x128xf32>
    %39 = math.roundeven %38 : vector<16x128xf32>
    %cst_22 = arith.constant -1.280000e+02 : f32
    %cst_23 = arith.constant 1.270000e+02 : f32
    %40 = vector.broadcast %cst_22 : f32 to vector<16x128xf32>
    %41 = arith.maximumf %40, %39 : vector<16x128xf32>
    %42 = vector.broadcast %cst_23 : f32 to vector<16x128xf32>
    %43 = arith.minimumf %42, %41 : vector<16x128xf32>
    %cst_24 = arith.constant 1.562500e-02 : f32
    %44 = vector.broadcast %cst_24 : f32 to vector<16x128xf32>
    %45 = arith.mulf %43, %44 : vector<16x128xf32>
    %46 = arith.truncf %45 : vector<16x128xf32> to vector<16x128xbf16>
    %c1_25 = arith.constant 1 : index
    %c0_26 = arith.constant 0 : index
    %c0_27 = arith.constant 0 : index
    %47 = vector.load %arg2[%c1_25, %c0_26, %c0_27] : memref<16x16x128xbf16, #tpu.memory_space<vmem>>, vector<1x16x128xbf16>
    %48 = vector.shape_cast %47 : vector<1x16x128xbf16> to vector<16x128xbf16>
    %49 = vector.shape_cast %46 : vector<16x128xbf16> to vector<1x16x128xbf16>
    tpu.vector_store %arg2[%c1_25, %c0_26, %c0_27], %49 {strides = array<i32>} : memref<16x16x128xbf16, #tpu.memory_space<vmem>>, vector<1x16x128xbf16>,
    %cst_28 = arith.constant 4.843750e-01 : f32
    %50 = vector.broadcast %cst_28 : f32 to vector<16x128xf32>
    %51 = arith.mulf %50, %32 : vector<16x128xf32>
    %52 = math.roundeven %51 : vector<16x128xf32>
    %cst_29 = arith.constant -1.280000e+02 : f32
    %cst_30 = arith.constant 1.270000e+02 : f32
    %53 = vector.broadcast %cst_29 : f32 to vector<16x128xf32>
    %54 = arith.maximumf %53, %52 : vector<16x128xf32>
    %55 = vector.broadcast %cst_30 : f32 to vector<16x128xf32>
    %56 = arith.minimumf %55, %54 : vector<16x128xf32>
    %cst_31 = arith.constant 1.562500e-02 : f32
    %57 = vector.broadcast %cst_31 : f32 to vector<16x128xf32>
    %58 = arith.mulf %56, %57 : vector<16x128xf32>
    %59 = arith.truncf %58 : vector<16x128xf32> to vector<16x128xbf16>
    %c2_32 = arith.constant 2 : index
    %c0_33 = arith.constant 0 : index
    %c0_34 = arith.constant 0 : index
    %60 = vector.load %arg2[%c2_32, %c0_33, %c0_34] : memref<16x16x128xbf16, #tpu.memory_space<vmem>>, vector<1x16x128xbf16>
    %61 = vector.shape_cast %60 : vector<1x16x128xbf16> to vector<16x128xbf16>
    %62 = vector.shape_cast %59 : vector<16x128xbf16> to vector<1x16x128xbf16>
    tpu.vector_store %arg2[%c2_32, %c0_33, %c0_34], %62 {strides = array<i32>} : memref<16x16x128xbf16, #tpu.memory_space<vmem>>, vector<1x16x128xbf16>,
    %cst_35 = arith.constant -4.843750e-01 : f32
    %63 = vector.broadcast %cst_35 : f32 to vector<16x128xf32>
    %64 = arith.mulf %63, %10 : vector<16x128xf32>
    %65 = math.roundeven %64 : vector<16x128xf32>
    %cst_36 = arith.constant -1.280000e+02 : f32
    %cst_37 = arith.constant 1.270000e+02 : f32
    %66 = vector.broadcast %cst_36 : f32 to vector<16x128xf32>
    %67 = arith.maximumf %66, %65 : vector<16x128xf32>
    %68 = vector.broadcast %cst_37 : f32 to vector<16x128xf32>
    %69 = arith.minimumf %68, %67 : vector<16x128xf32>
    %cst_38 = arith.constant 1.562500e-02 : f32
    %70 = vector.broadcast %cst_38 : f32 to vector<16x128xf32>
    %71 = arith.mulf %69, %70 : vector<16x128xf32>
    %72 = arith.truncf %71 : vector<16x128xf32> to vector<16x128xbf16>
    %c3 = arith.constant 3 : index
    %c0_39 = arith.constant 0 : index
    %c0_40 = arith.constant 0 : index
    %73 = vector.load %arg2[%c3, %c0_39, %c0_40] : memref<16x16x128xbf16, #tpu.memory_space<vmem>>, vector<1x16x128xbf16>
    %74 = vector.shape_cast %73 : vector<1x16x128xbf16> to vector<16x128xbf16>
    %75 = vector.shape_cast %72 : vector<16x128xbf16> to vector<1x16x128xbf16>
    tpu.vector_store %arg2[%c3, %c0_39, %c0_40], %75 {strides = array<i32>} : memref<16x16x128xbf16, #tpu.memory_space<vmem>>, vector<1x16x128xbf16>,
    %76 = arith.mulf %10, %21 : vector<16x128xf32>
    %cst_41 = arith.constant 1.562500e-02 : f32
    %77 = vector.broadcast %cst_41 : f32 to vector<16x128xf32>
    %78 = arith.mulf %76, %77 : vector<16x128xf32>
    %79 = math.roundeven %78 : vector<16x128xf32>
    %cst_42 = arith.constant -1.280000e+02 : f32
    %cst_43 = arith.constant 1.270000e+02 : f32
    %80 = vector.broadcast %cst_42 : f32 to vector<16x128xf32>
    %81 = arith.maximumf %80, %79 : vector<16x128xf32>
    %82 = vector.broadcast %cst_43 : f32 to vector<16x128xf32>
    %83 = arith.minimumf %82, %81 : vector<16x128xf32>
    %84 = arith.mulf %10, %32 : vector<16x128xf32>
    %cst_44 = arith.constant 1.562500e-02 : f32
    %85 = vector.broadcast %cst_44 : f32 to vector<16x128xf32>
    %86 = arith.mulf %84, %85 : vector<16x128xf32>
    %87 = math.roundeven %86 : vector<16x128xf32>
    %cst_45 = arith.constant -1.280000e+02 : f32
    %cst_46 = arith.constant 1.270000e+02 : f32
    %88 = vector.broadcast %cst_45 : f32 to vector<16x128xf32>
    %89 = arith.maximumf %88, %87 : vector<16x128xf32>
    %90 = vector.broadcast %cst_46 : f32 to vector<16x128xf32>
    %91 = arith.minimumf %90, %89 : vector<16x128xf32>
    %92 = arith.mulf %21, %32 : vector<16x128xf32>
    %cst_47 = arith.constant 1.562500e-02 : f32
    %93 = vector.broadcast %cst_47 : f32 to vector<16x128xf32>
    %94 = arith.mulf %92, %93 : vector<16x128xf32>
    %95 = math.roundeven %94 : vector<16x128xf32>
    %cst_48 = arith.constant -1.280000e+02 : f32
    %cst_49 = arith.constant 1.270000e+02 : f32
    %96 = vector.broadcast %cst_48 : f32 to vector<16x128xf32>
    %97 = arith.maximumf %96, %95 : vector<16x128xf32>
    %98 = vector.broadcast %cst_49 : f32 to vector<16x128xf32>
    %99 = arith.minimumf %98, %97 : vector<16x128xf32>
    %100 = arith.mulf %10, %10 : vector<16x128xf32>
    %cst_50 = arith.constant 1.562500e-02 : f32
    %101 = vector.broadcast %cst_50 : f32 to vector<16x128xf32>
    %102 = arith.mulf %100, %101 : vector<16x128xf32>
    %103 = math.roundeven %102 : vector<16x128xf32>
    %cst_51 = arith.constant -1.280000e+02 : f32
    %cst_52 = arith.constant 1.270000e+02 : f32
    %104 = vector.broadcast %cst_51 : f32 to vector<16x128xf32>
    %105 = arith.maximumf %104, %103 : vector<16x128xf32>
    %106 = vector.broadcast %cst_52 : f32 to vector<16x128xf32>
    %107 = arith.minimumf %106, %105 : vector<16x128xf32>
    %108 = arith.mulf %21, %21 : vector<16x128xf32>
    %cst_53 = arith.constant 1.562500e-02 : f32
    %109 = vector.broadcast %cst_53 : f32 to vector<16x128xf32>
    %110 = arith.mulf %108, %109 : vector<16x128xf32>
    %111 = math.roundeven %110 : vector<16x128xf32>
    %cst_54 = arith.constant -1.280000e+02 : f32
    %cst_55 = arith.constant 1.270000e+02 : f32
    %112 = vector.broadcast %cst_54 : f32 to vector<16x128xf32>
    %113 = arith.maximumf %112, %111 : vector<16x128xf32>
    %114 = vector.broadcast %cst_55 : f32 to vector<16x128xf32>
    %115 = arith.minimumf %114, %113 : vector<16x128xf32>
    %116 = arith.mulf %32, %32 : vector<16x128xf32>
    %cst_56 = arith.constant 1.562500e-02 : f32
    %117 = vector.broadcast %cst_56 : f32 to vector<16x128xf32>
    %118 = arith.mulf %116, %117 : vector<16x128xf32>
    %119 = math.roundeven %118 : vector<16x128xf32>
    %cst_57 = arith.constant -1.280000e+02 : f32
    %cst_58 = arith.constant 1.270000e+02 : f32
    %120 = vector.broadcast %cst_57 : f32 to vector<16x128xf32>
    %121 = arith.maximumf %120, %119 : vector<16x128xf32>
    %122 = vector.broadcast %cst_58 : f32 to vector<16x128xf32>
    %123 = arith.minimumf %122, %121 : vector<16x128xf32>
    %124 = arith.subf %107, %115 : vector<16x128xf32>
    %cst_59 = arith.constant 1.093750e+00 : f32
    %125 = vector.broadcast %cst_59 : f32 to vector<16x128xf32>
    %126 = arith.mulf %125, %83 : vector<16x128xf32>
    %127 = math.roundeven %126 : vector<16x128xf32>
    %cst_60 = arith.constant -1.280000e+02 : f32
    %cst_61 = arith.constant 1.270000e+02 : f32
    %128 = vector.broadcast %cst_60 : f32 to vector<16x128xf32>
    %129 = arith.maximumf %128, %127 : vector<16x128xf32>
    %130 = vector.broadcast %cst_61 : f32 to vector<16x128xf32>
    %131 = arith.minimumf %130, %129 : vector<16x128xf32>
    %cst_62 = arith.constant 1.562500e-02 : f32
    %132 = vector.broadcast %cst_62 : f32 to vector<16x128xf32>
    %133 = arith.mulf %131, %132 : vector<16x128xf32>
    %134 = arith.truncf %133 : vector<16x128xf32> to vector<16x128xbf16>
    %c4 = arith.constant 4 : index
    %c0_63 = arith.constant 0 : index
    %c0_64 = arith.constant 0 : index
    %135 = vector.load %arg2[%c4, %c0_63, %c0_64] : memref<16x16x128xbf16, #tpu.memory_space<vmem>>, vector<1x16x128xbf16>
    %136 = vector.shape_cast %135 : vector<1x16x128xbf16> to vector<16x128xbf16>
    %137 = vector.shape_cast %134 : vector<16x128xbf16> to vector<1x16x128xbf16>
    tpu.vector_store %arg2[%c4, %c0_63, %c0_64], %137 {strides = array<i32>} : memref<16x16x128xbf16, #tpu.memory_space<vmem>>, vector<1x16x128xbf16>,
    %cst_65 = arith.constant -1.093750e+00 : f32
    %138 = vector.broadcast %cst_65 : f32 to vector<16x128xf32>
    %139 = arith.mulf %138, %99 : vector<16x128xf32>
    %140 = math.roundeven %139 : vector<16x128xf32>
    %cst_66 = arith.constant -1.280000e+02 : f32
    %cst_67 = arith.constant 1.270000e+02 : f32
    %141 = vector.broadcast %cst_66 : f32 to vector<16x128xf32>
    %142 = arith.maximumf %141, %140 : vector<16x128xf32>
    %143 = vector.broadcast %cst_67 : f32 to vector<16x128xf32>
    %144 = arith.minimumf %143, %142 : vector<16x128xf32>
    %cst_68 = arith.constant 1.562500e-02 : f32
    %145 = vector.broadcast %cst_68 : f32 to vector<16x128xf32>
    %146 = arith.mulf %144, %145 : vector<16x128xf32>
    %147 = arith.truncf %146 : vector<16x128xf32> to vector<16x128xbf16>
    %c5 = arith.constant 5 : index
    %c0_69 = arith.constant 0 : index
    %c0_70 = arith.constant 0 : index
    %148 = vector.load %arg2[%c5, %c0_69, %c0_70] : memref<16x16x128xbf16, #tpu.memory_space<vmem>>, vector<1x16x128xbf16>
    %149 = vector.shape_cast %148 : vector<1x16x128xbf16> to vector<16x128xbf16>
    %150 = vector.shape_cast %147 : vector<16x128xbf16> to vector<1x16x128xbf16>
    tpu.vector_store %arg2[%c5, %c0_69, %c0_70], %150 {strides = array<i32>} : memref<16x16x128xbf16, #tpu.memory_space<vmem>>, vector<1x16x128xbf16>,
    %cst_71 = arith.constant 9.531250e-01 : f32
    %151 = vector.broadcast %cst_71 : f32 to vector<16x128xf32>
    %152 = arith.mulf %151, %123 : vector<16x128xf32>
    %cst_72 = arith.constant 2.000000e+01 : f32
    %153 = vector.broadcast %cst_72 : f32 to vector<16x128xf32>
    %154 = arith.subf %152, %153 : vector<16x128xf32>
    %155 = math.roundeven %154 : vector<16x128xf32>
    %cst_73 = arith.constant -1.280000e+02 : f32
    %cst_74 = arith.constant 1.270000e+02 : f32
    %156 = vector.broadcast %cst_73 : f32 to vector<16x128xf32>
    %157 = arith.maximumf %156, %155 : vector<16x128xf32>
    %158 = vector.broadcast %cst_74 : f32 to vector<16x128xf32>
    %159 = arith.minimumf %158, %157 : vector<16x128xf32>
    %cst_75 = arith.constant 1.562500e-02 : f32
    %160 = vector.broadcast %cst_75 : f32 to vector<16x128xf32>
    %161 = arith.mulf %159, %160 : vector<16x128xf32>
    %162 = arith.truncf %161 : vector<16x128xf32> to vector<16x128xbf16>
    %c6 = arith.constant 6 : index
    %c0_76 = arith.constant 0 : index
    %c0_77 = arith.constant 0 : index
    %163 = vector.load %arg2[%c6, %c0_76, %c0_77] : memref<16x16x128xbf16, #tpu.memory_space<vmem>>, vector<1x16x128xbf16>
    %164 = vector.shape_cast %163 : vector<1x16x128xbf16> to vector<16x128xbf16>
    %165 = vector.shape_cast %162 : vector<16x128xbf16> to vector<1x16x128xbf16>
    tpu.vector_store %arg2[%c6, %c0_76, %c0_77], %165 {strides = array<i32>} : memref<16x16x128xbf16, #tpu.memory_space<vmem>>, vector<1x16x128xbf16>,
    %cst_78 = arith.constant -1.093750e+00 : f32
    %166 = vector.broadcast %cst_78 : f32 to vector<16x128xf32>
    %167 = arith.mulf %166, %91 : vector<16x128xf32>
    %168 = math.roundeven %167 : vector<16x128xf32>
    %cst_79 = arith.constant -1.280000e+02 : f32
    %cst_80 = arith.constant 1.270000e+02 : f32
    %169 = vector.broadcast %cst_79 : f32 to vector<16x128xf32>
    %170 = arith.maximumf %169, %168 : vector<16x128xf32>
    %171 = vector.broadcast %cst_80 : f32 to vector<16x128xf32>
    %172 = arith.minimumf %171, %170 : vector<16x128xf32>
    %cst_81 = arith.constant 1.562500e-02 : f32
    %173 = vector.broadcast %cst_81 : f32 to vector<16x128xf32>
    %174 = arith.mulf %172, %173 : vector<16x128xf32>
    %175 = arith.truncf %174 : vector<16x128xf32> to vector<16x128xbf16>
    %c7 = arith.constant 7 : index
    %c0_82 = arith.constant 0 : index
    %c0_83 = arith.constant 0 : index
    %176 = vector.load %arg2[%c7, %c0_82, %c0_83] : memref<16x16x128xbf16, #tpu.memory_space<vmem>>, vector<1x16x128xbf16>
    %177 = vector.shape_cast %176 : vector<1x16x128xbf16> to vector<16x128xbf16>
    %178 = vector.shape_cast %175 : vector<16x128xbf16> to vector<1x16x128xbf16>
    tpu.vector_store %arg2[%c7, %c0_82, %c0_83], %178 {strides = array<i32>} : memref<16x16x128xbf16, #tpu.memory_space<vmem>>, vector<1x16x128xbf16>,
    %cst_84 = arith.constant 5.468750e-01 : f32
    %179 = vector.broadcast %cst_84 : f32 to vector<16x128xf32>
    %180 = arith.mulf %179, %124 : vector<16x128xf32>
    %181 = math.roundeven %180 : vector<16x128xf32>
    %cst_85 = arith.constant -1.280000e+02 : f32
    %cst_86 = arith.constant 1.270000e+02 : f32
    %182 = vector.broadcast %cst_85 : f32 to vector<16x128xf32>
    %183 = arith.maximumf %182, %181 : vector<16x128xf32>
    %184 = vector.broadcast %cst_86 : f32 to vector<16x128xf32>
    %185 = arith.minimumf %184, %183 : vector<16x128xf32>
    %cst_87 = arith.constant 1.562500e-02 : f32
    %186 = vector.broadcast %cst_87 : f32 to vector<16x128xf32>
    %187 = arith.mulf %185, %186 : vector<16x128xf32>
    %188 = arith.truncf %187 : vector<16x128xf32> to vector<16x128xbf16>
    %c8 = arith.constant 8 : index
    %c0_88 = arith.constant 0 : index
    %c0_89 = arith.constant 0 : index
    %189 = vector.load %arg2[%c8, %c0_88, %c0_89] : memref<16x16x128xbf16, #tpu.memory_space<vmem>>, vector<1x16x128xbf16>
    %190 = vector.shape_cast %189 : vector<1x16x128xbf16> to vector<16x128xbf16>
    %191 = vector.shape_cast %188 : vector<16x128xbf16> to vector<1x16x128xbf16>
    tpu.vector_store %arg2[%c8, %c0_88, %c0_89], %191 {strides = array<i32>} : memref<16x16x128xbf16, #tpu.memory_space<vmem>>, vector<1x16x128xbf16>,
    %cst_90 = arith.constant 5.000000e+00 : f32
    %192 = vector.broadcast %cst_90 : f32 to vector<16x128xf32>
    %193 = arith.mulf %192, %123 : vector<16x128xf32>
    %cst_91 = arith.constant 6.400000e+01 : f32
    %194 = vector.broadcast %cst_91 : f32 to vector<16x128xf32>
    %195 = arith.subf %194, %193 : vector<16x128xf32>
    %cst_92 = arith.constant -1.280000e+02 : f32
    %cst_93 = arith.constant 1.270000e+02 : f32
    %196 = vector.broadcast %cst_92 : f32 to vector<16x128xf32>
    %197 = arith.maximumf %196, %195 : vector<16x128xf32>
    %198 = vector.broadcast %cst_93 : f32 to vector<16x128xf32>
    %199 = arith.minimumf %198, %197 : vector<16x128xf32>
    %cst_94 = arith.constant 1.920000e+02 : f32
    %200 = vector.broadcast %cst_94 : f32 to vector<16x128xf32>
    %201 = arith.subf %193, %200 : vector<16x128xf32>
    %cst_95 = arith.constant -1.280000e+02 : f32
    %cst_96 = arith.constant 1.270000e+02 : f32
    %202 = vector.broadcast %cst_95 : f32 to vector<16x128xf32>
    %203 = arith.maximumf %202, %201 : vector<16x128xf32>
    %204 = vector.broadcast %cst_96 : f32 to vector<16x128xf32>
    %205 = arith.minimumf %204, %203 : vector<16x128xf32>
    %cst_97 = arith.constant 3.000000e+00 : f32
    %206 = vector.broadcast %cst_97 : f32 to vector<16x128xf32>
    %207 = arith.mulf %206, %107 : vector<16x128xf32>
    %208 = arith.subf %115, %207 : vector<16x128xf32>
    %cst_98 = arith.constant -1.280000e+02 : f32
    %cst_99 = arith.constant 1.270000e+02 : f32
    %209 = vector.broadcast %cst_98 : f32 to vector<16x128xf32>
    %210 = arith.maximumf %209, %208 : vector<16x128xf32>
    %211 = vector.broadcast %cst_99 : f32 to vector<16x128xf32>
    %212 = arith.minimumf %211, %210 : vector<16x128xf32>
    %cst_100 = arith.constant 3.000000e+00 : f32
    %213 = vector.broadcast %cst_100 : f32 to vector<16x128xf32>
    %214 = arith.mulf %213, %115 : vector<16x128xf32>
    %215 = arith.subf %214, %107 : vector<16x128xf32>
    %cst_101 = arith.constant -1.280000e+02 : f32
    %cst_102 = arith.constant 1.270000e+02 : f32
    %216 = vector.broadcast %cst_101 : f32 to vector<16x128xf32>
    %217 = arith.maximumf %216, %215 : vector<16x128xf32>
    %218 = vector.broadcast %cst_102 : f32 to vector<16x128xf32>
    %219 = arith.minimumf %218, %217 : vector<16x128xf32>
    %cst_103 = arith.constant -1.280000e+02 : f32
    %cst_104 = arith.constant 1.270000e+02 : f32
    %220 = vector.broadcast %cst_103 : f32 to vector<16x128xf32>
    %221 = arith.maximumf %220, %124 : vector<16x128xf32>
    %222 = vector.broadcast %cst_104 : f32 to vector<16x128xf32>
    %223 = arith.minimumf %222, %221 : vector<16x128xf32>
    %cst_105 = arith.constant 0.00927734375 : f32
    %224 = vector.broadcast %cst_105 : f32 to vector<16x128xf32>
    %225 = arith.mulf %224, %21 : vector<16x128xf32>
    %226 = arith.mulf %225, %212 : vector<16x128xf32>
    %227 = math.roundeven %226 : vector<16x128xf32>
    %cst_106 = arith.constant -1.280000e+02 : f32
    %cst_107 = arith.constant 1.270000e+02 : f32
    %228 = vector.broadcast %cst_106 : f32 to vector<16x128xf32>
    %229 = arith.maximumf %228, %227 : vector<16x128xf32>
    %230 = vector.broadcast %cst_107 : f32 to vector<16x128xf32>
    %231 = arith.minimumf %230, %229 : vector<16x128xf32>
    %cst_108 = arith.constant 1.562500e-02 : f32
    %232 = vector.broadcast %cst_108 : f32 to vector<16x128xf32>
    %233 = arith.mulf %231, %232 : vector<16x128xf32>
    %234 = arith.truncf %233 : vector<16x128xf32> to vector<16x128xbf16>
    %c9 = arith.constant 9 : index
    %c0_109 = arith.constant 0 : index
    %c0_110 = arith.constant 0 : index
    %235 = vector.load %arg2[%c9, %c0_109, %c0_110] : memref<16x16x128xbf16, #tpu.memory_space<vmem>>, vector<1x16x128xbf16>
    %236 = vector.shape_cast %235 : vector<1x16x128xbf16> to vector<16x128xbf16>
    %237 = vector.shape_cast %234 : vector<16x128xbf16> to vector<1x16x128xbf16>
    tpu.vector_store %arg2[%c9, %c0_109, %c0_110], %237 {strides = array<i32>} : memref<16x16x128xbf16, #tpu.memory_space<vmem>>, vector<1x16x128xbf16>,
    %cst_111 = arith.constant 0.0310058594 : f32
    %238 = vector.broadcast %cst_111 : f32 to vector<16x128xf32>
    %239 = arith.mulf %238, %83 : vector<16x128xf32>
    %240 = arith.mulf %239, %32 : vector<16x128xf32>
    %241 = math.roundeven %240 : vector<16x128xf32>
    %cst_112 = arith.constant -1.280000e+02 : f32
    %cst_113 = arith.constant 1.270000e+02 : f32
    %242 = vector.broadcast %cst_112 : f32 to vector<16x128xf32>
    %243 = arith.maximumf %242, %241 : vector<16x128xf32>
    %244 = vector.broadcast %cst_113 : f32 to vector<16x128xf32>
    %245 = arith.minimumf %244, %243 : vector<16x128xf32>
    %cst_114 = arith.constant 1.562500e-02 : f32
    %246 = vector.broadcast %cst_114 : f32 to vector<16x128xf32>
    %247 = arith.mulf %245, %246 : vector<16x128xf32>
    %248 = arith.truncf %247 : vector<16x128xf32> to vector<16x128xbf16>
    %c10 = arith.constant 10 : index
    %c0_115 = arith.constant 0 : index
    %c0_116 = arith.constant 0 : index
    %249 = vector.load %arg2[%c10, %c0_115, %c0_116] : memref<16x16x128xbf16, #tpu.memory_space<vmem>>, vector<1x16x128xbf16>
    %250 = vector.shape_cast %249 : vector<1x16x128xbf16> to vector<16x128xbf16>
    %251 = vector.shape_cast %248 : vector<16x128xbf16> to vector<1x16x128xbf16>
    tpu.vector_store %arg2[%c10, %c0_115, %c0_116], %251 {strides = array<i32>} : memref<16x16x128xbf16, #tpu.memory_space<vmem>>, vector<1x16x128xbf16>,
    %cst_117 = arith.constant 0.00708007813 : f32
    %252 = vector.broadcast %cst_117 : f32 to vector<16x128xf32>
    %253 = arith.mulf %252, %21 : vector<16x128xf32>
    %254 = arith.mulf %253, %199 : vector<16x128xf32>
    %255 = math.roundeven %254 : vector<16x128xf32>
    %cst_118 = arith.constant -1.280000e+02 : f32
    %cst_119 = arith.constant 1.270000e+02 : f32
    %256 = vector.broadcast %cst_118 : f32 to vector<16x128xf32>
    %257 = arith.maximumf %256, %255 : vector<16x128xf32>
    %258 = vector.broadcast %cst_119 : f32 to vector<16x128xf32>
    %259 = arith.minimumf %258, %257 : vector<16x128xf32>
    %cst_120 = arith.constant 1.562500e-02 : f32
    %260 = vector.broadcast %cst_120 : f32 to vector<16x128xf32>
    %261 = arith.mulf %259, %260 : vector<16x128xf32>
    %262 = arith.truncf %261 : vector<16x128xf32> to vector<16x128xbf16>
    %c11 = arith.constant 11 : index
    %c0_121 = arith.constant 0 : index
    %c0_122 = arith.constant 0 : index
    %263 = vector.load %arg2[%c11, %c0_121, %c0_122] : memref<16x16x128xbf16, #tpu.memory_space<vmem>>, vector<1x16x128xbf16>
    %264 = vector.shape_cast %263 : vector<1x16x128xbf16> to vector<16x128xbf16>
    %265 = vector.shape_cast %262 : vector<16x128xbf16> to vector<1x16x128xbf16>
    tpu.vector_store %arg2[%c11, %c0_121, %c0_122], %265 {strides = array<i32>} : memref<16x16x128xbf16, #tpu.memory_space<vmem>>, vector<1x16x128xbf16>,
    %cst_123 = arith.constant 0.005859375 : f32
    %266 = vector.broadcast %cst_123 : f32 to vector<16x128xf32>
    %267 = arith.mulf %266, %32 : vector<16x128xf32>
    %268 = arith.mulf %267, %205 : vector<16x128xf32>
    %269 = math.roundeven %268 : vector<16x128xf32>
    %cst_124 = arith.constant -1.280000e+02 : f32
    %cst_125 = arith.constant 1.270000e+02 : f32
    %270 = vector.broadcast %cst_124 : f32 to vector<16x128xf32>
    %271 = arith.maximumf %270, %269 : vector<16x128xf32>
    %272 = vector.broadcast %cst_125 : f32 to vector<16x128xf32>
    %273 = arith.minimumf %272, %271 : vector<16x128xf32>
    %cst_126 = arith.constant 1.562500e-02 : f32
    %274 = vector.broadcast %cst_126 : f32 to vector<16x128xf32>
    %275 = arith.mulf %273, %274 : vector<16x128xf32>
    %276 = arith.truncf %275 : vector<16x128xf32> to vector<16x128xbf16>
    %c12 = arith.constant 12 : index
    %c0_127 = arith.constant 0 : index
    %c0_128 = arith.constant 0 : index
    %277 = vector.load %arg2[%c12, %c0_127, %c0_128] : memref<16x16x128xbf16, #tpu.memory_space<vmem>>, vector<1x16x128xbf16>
    %278 = vector.shape_cast %277 : vector<1x16x128xbf16> to vector<16x128xbf16>
    %279 = vector.shape_cast %276 : vector<16x128xbf16> to vector<1x16x128xbf16>
    tpu.vector_store %arg2[%c12, %c0_127, %c0_128], %279 {strides = array<i32>} : memref<16x16x128xbf16, #tpu.memory_space<vmem>>, vector<1x16x128xbf16>,
    %cst_129 = arith.constant 0.00708007813 : f32
    %280 = vector.broadcast %cst_129 : f32 to vector<16x128xf32>
    %281 = arith.mulf %280, %10 : vector<16x128xf32>
    %282 = arith.mulf %281, %199 : vector<16x128xf32>
    %283 = math.roundeven %282 : vector<16x128xf32>
    %cst_130 = arith.constant -1.280000e+02 : f32
    %cst_131 = arith.constant 1.270000e+02 : f32
    %284 = vector.broadcast %cst_130 : f32 to vector<16x128xf32>
    %285 = arith.maximumf %284, %283 : vector<16x128xf32>
    %286 = vector.broadcast %cst_131 : f32 to vector<16x128xf32>
    %287 = arith.minimumf %286, %285 : vector<16x128xf32>
    %cst_132 = arith.constant 1.562500e-02 : f32
    %288 = vector.broadcast %cst_132 : f32 to vector<16x128xf32>
    %289 = arith.mulf %287, %288 : vector<16x128xf32>
    %290 = arith.truncf %289 : vector<16x128xf32> to vector<16x128xbf16>
    %c13 = arith.constant 13 : index
    %c0_133 = arith.constant 0 : index
    %c0_134 = arith.constant 0 : index
    %291 = vector.load %arg2[%c13, %c0_133, %c0_134] : memref<16x16x128xbf16, #tpu.memory_space<vmem>>, vector<1x16x128xbf16>
    %292 = vector.shape_cast %291 : vector<1x16x128xbf16> to vector<16x128xbf16>
    %293 = vector.shape_cast %290 : vector<16x128xbf16> to vector<1x16x128xbf16>
    tpu.vector_store %arg2[%c13, %c0_133, %c0_134], %293 {strides = array<i32>} : memref<16x16x128xbf16, #tpu.memory_space<vmem>>, vector<1x16x128xbf16>,
    %cst_135 = arith.constant 0.0224609375 : f32
    %294 = vector.broadcast %cst_135 : f32 to vector<16x128xf32>
    %295 = arith.mulf %294, %32 : vector<16x128xf32>
    %296 = arith.mulf %295, %223 : vector<16x128xf32>
    %297 = math.roundeven %296 : vector<16x128xf32>
    %cst_136 = arith.constant -1.280000e+02 : f32
    %cst_137 = arith.constant 1.270000e+02 : f32
    %298 = vector.broadcast %cst_136 : f32 to vector<16x128xf32>
    %299 = arith.maximumf %298, %297 : vector<16x128xf32>
    %300 = vector.broadcast %cst_137 : f32 to vector<16x128xf32>
    %301 = arith.minimumf %300, %299 : vector<16x128xf32>
    %cst_138 = arith.constant 1.562500e-02 : f32
    %302 = vector.broadcast %cst_138 : f32 to vector<16x128xf32>
    %303 = arith.mulf %301, %302 : vector<16x128xf32>
    %304 = arith.truncf %303 : vector<16x128xf32> to vector<16x128xbf16>
    %c14 = arith.constant 14 : index
    %c0_139 = arith.constant 0 : index
    %c0_140 = arith.constant 0 : index
    %305 = vector.load %arg2[%c14, %c0_139, %c0_140] : memref<16x16x128xbf16, #tpu.memory_space<vmem>>, vector<1x16x128xbf16>
    %306 = vector.shape_cast %305 : vector<1x16x128xbf16> to vector<16x128xbf16>
    %307 = vector.shape_cast %304 : vector<16x128xbf16> to vector<1x16x128xbf16>
    tpu.vector_store %arg2[%c14, %c0_139, %c0_140], %307 {strides = array<i32>} : memref<16x16x128xbf16, #tpu.memory_space<vmem>>, vector<1x16x128xbf16>,
    %cst_141 = arith.constant 0.00927734375 : f32
    %308 = vector.broadcast %cst_141 : f32 to vector<16x128xf32>
    %309 = arith.mulf %308, %10 : vector<16x128xf32>
    %310 = arith.mulf %309, %219 : vector<16x128xf32>
    %311 = math.roundeven %310 : vector<16x128xf32>
    %cst_142 = arith.constant -1.280000e+02 : f32
    %cst_143 = arith.constant 1.270000e+02 : f32
    %312 = vector.broadcast %cst_142 : f32 to vector<16x128xf32>
    %313 = arith.maximumf %312, %311 : vector<16x128xf32>
    %314 = vector.broadcast %cst_143 : f32 to vector<16x128xf32>
    %315 = arith.minimumf %314, %313 : vector<16x128xf32>
    %cst_144 = arith.constant 1.562500e-02 : f32
    %316 = vector.broadcast %cst_144 : f32 to vector<16x128xf32>
    %317 = arith.mulf %315, %316 : vector<16x128xf32>
    %318 = arith.truncf %317 : vector<16x128xf32> to vector<16x128xbf16>
    %c15 = arith.constant 15 : index
    %c0_145 = arith.constant 0 : index
    %c0_146 = arith.constant 0 : index
    %319 = vector.load %arg2[%c15, %c0_145, %c0_146] : memref<16x16x128xbf16, #tpu.memory_space<vmem>>, vector<1x16x128xbf16>
    %320 = vector.shape_cast %319 : vector<1x16x128xbf16> to vector<16x128xbf16>
    %321 = vector.shape_cast %318 : vector<16x128xbf16> to vector<1x16x128xbf16>
    tpu.vector_store %arg2[%c15, %c0_145, %c0_146], %321 {strides = array<i32>} : memref<16x16x128xbf16, #tpu.memory_space<vmem>>, vector<1x16x128xbf16>,
    return
  }
  func.func @transform_0(%arg0: i32) -> (i32, i32, i32) {
    %c0_i32 = arith.constant 0 : i32
    %c0_i32_0 = arith.constant 0 : i32
    %c0_i32_1 = arith.constant 0 : i32
    return %c0_i32, %arg0, %c0_i32_0 : i32, i32, i32
  }
  func.func @transform_1(%arg0: i32) -> (i32, i32, i32) {
    %c0_i32 = arith.constant 0 : i32
    %c0_i32_0 = arith.constant 0 : i32
    %c0_i32_1 = arith.constant 0 : i32
    return %c0_i32, %arg0, %c0_i32_0 : i32, i32, i32
  }
}

</mosaic_0001>

<llo_original>
// kernel: tpu_custom_call.1
$region0: #{tpu_custom_call.1}
  #allocation0 [shape = 'u32[]', space=smem, size = 0x4, offset = 0x4, fixed_abs, tag = 'smem constant byte address 0x4 - core index']
  #allocation1 [shape = 'u32[144,128]{1,0:T(1,128)}', space=vmem, size = 0x12000, scoped, tag = 'internal scratch']
  %s0 = inlined_call_operand.hbm [shape: f32[3,16,128], index: 0, kind: input, shape index: {}]
  %s1 = inlined_call_operand.hbm [shape: bf16[16,16,128], index: 1, kind: output, shape index: {}]
  %s2 = sld [smem:[#allocation0]]
  $region18: #{tpu_custom_call.1} parent=0
    _
  %s4 = ssub.s32 1, %s2
  %s5 = scalar_select 0, %s4, %s2
  $region1: #{tpu_custom_call.1} parent=0
    #allocation2 [shape = 'u8[24576]{0}', space=vmem, size = 0x6000, scoped, tag = 'input window, operand 0, single buffered']
    #allocation3 [shape = 's32[1]{0}', space=sflag, size = 0x4, scoped, tag = 'scoped memory for tpu_custom_call.1']
    #allocation4 [shape = 's32[1]{0}', space=sflag, size = 0x4, scoped, tag = 'scoped memory for tpu_custom_call.1']
    #allocation5 [shape = 'u8[65536]{0}', space=vmem, size = 0x10000, scoped, tag = 'output window, operand 0, single buffered']
    %6 = vsyncpa [#allocation3], 0
    %7 = vsyncpa [#allocation4], 0
    // Predicated region
    $region2: #{tpu_custom_call.1} parent=1 // pred_check
      _
    $region3: #{tpu_custom_call.1} parent=1 // pred_check_branch
      %9 = sbr.rel (0) target = $region5
    $region4: #{tpu_custom_call.1} parent=1 // pred_region
      %s11 = ssub.s32 768, 768
      %12 = vsyncadd [#allocation3], %s11
      %s13 = sshll.u32 [#allocation2], 4
      %s14 = int_to_ptr.vmem [resolvable:$true] %s13
      %19 = dma.hbm_to_vmem [thread:$0]  %s0, 768, %s14, [#allocation3], 128, 128, 8
    $region5: #{tpu_custom_call.1} parent=1 // pred_fallthru
      _
    // Predicated region
    $region6: #{tpu_custom_call.1} parent=1 // pred_check
      _
    $region7: #{tpu_custom_call.1} parent=1 // pred_check_branch
      %21 = sbr.rel (0) target = $region9
    $region8: #{tpu_custom_call.1} parent=1 // pred_region
      %22 = dma.done [#allocation3], 768
    $region9: #{tpu_custom_call.1} parent=1 // pred_fallthru
      _
    %v24 = vld [vmem:[#allocation2] sm:$0xff]
    %v25 = vld [vmem:[#allocation2 + $0x8] sm:$0xff]
    %v26 = vmul.f32 %v24, 128.0
    %v27 = vmul.f32 %v25, 128.0
    %v28 = vsub.f32 %v26, 64.0
    %v29 = vsub.f32 %v27, 64.0
    %v30 = vround.ne.pseudo %v28
    %v31 = vround.ne.pseudo %v29
    %v32 = vmax.f32 %v30, -128.0
    %v33 = vmax.f32 %v31, -128.0
    %v34 = vmin.f32 %v32, 127.0
    %v35 = vmin.f32 %v33, 127.0
    %s36 = scalar_lea.vmem [#allocation2], 16
    %v37 = vld [vmem:[%s36] sm:$0xff]
    %v38 = vld [vmem:[%s36 + $0x8] sm:$0xff]
    %v39 = vmul.f32 %v37, 128.0
    %v40 = vmul.f32 %v38, 128.0
    %v41 = vsub.f32 %v39, 64.0
    %v42 = vsub.f32 %v40, 64.0
    %v43 = vround.ne.pseudo %v41
    %v44 = vround.ne.pseudo %v42
    %v45 = vmax.f32 %v43, -128.0
    %v46 = vmax.f32 %v44, -128.0
    %v47 = vmin.f32 %v45, 127.0
    %v48 = vmin.f32 %v46, 127.0
    %s49 = scalar_lea.vmem [#allocation2], 32
    %v50 = vld [vmem:[%s49] sm:$0xff]
    %v51 = vld [vmem:[%s49 + $0x8] sm:$0xff]
    %v52 = vmul.f32 %v50, 128.0
    %v53 = vmul.f32 %v51, 128.0
    %v54 = vsub.f32 %v52, 64.0
    %v55 = vsub.f32 %v53, 64.0
    %v56 = vround.ne.pseudo %v54
    %v57 = vround.ne.pseudo %v55
    %v58 = vmax.f32 %v56, -128.0
    %v59 = vmax.f32 %v57, -128.0
    %v60 = vmin.f32 %v58, 127.0
    %v61 = vmin.f32 %v59, 127.0
    %62 = vst [vmem:[#allocation5] sm:$0xf] 1049640592
    %63 = vst [vmem:[#allocation5 + $0x4] sm:$0xf] 1049640592
    %v64 = vmul.f32 %v47, -0.484375
    %v65 = vmul.f32 %v48, -0.484375
    %v66 = vround.ne.pseudo %v64
    %v67 = vround.ne.pseudo %v65
    %v68 = vmax.f32 %v66, -128.0
    %v69 = vmax.f32 %v67, -128.0
    %v70 = vmin.f32 %v68, 127.0
    %v71 = vmin.f32 %v69, 127.0
    %v72 = vmul.f32 %v70, 0.015625
    %v73 = vmul.f32 %v71, 0.015625
    %v74 = vpack.c.bf16 %v73, %v72
    %v76 = vunpack.c.l.b16 %v74
    %v77 = vunpack.c.h.b16 %v74
    %v78 = vpack.c.b16 %v76, %v76
    %v79 = vpack.c.b16 %v77, %v77
    %s82 = scalar_lea.vmem [#allocation5], 8
    %83 = vst [vmem:[%s82] sm:$0xf] %v78
    %84 = vst [vmem:[%s82 + $0x4] sm:$0xf] %v79
    %v85 = vmul.f32 %v60, 0.484375
    %v86 = vmul.f32 %v61, 0.484375
    %v87 = vround.ne.pseudo %v85
    %v88 = vround.ne.pseudo %v86
    %v89 = vmax.f32 %v87, -128.0
    %v90 = vmax.f32 %v88, -128.0
    %v91 = vmin.f32 %v89, 127.0
    %v92 = vmin.f32 %v90, 127.0
    %v93 = vmul.f32 %v91, 0.015625
    %v94 = vmul.f32 %v92, 0.015625
    %v95 = vpack.c.bf16 %v94, %v93
    %v97 = vunpack.c.l.b16 %v95
    %v98 = vunpack.c.h.b16 %v95
    %v99 = vpack.c.b16 %v97, %v97
    %v100 = vpack.c.b16 %v98, %v98
    %s103 = scalar_lea.vmem [#allocation5], 16
    %104 = vst [vmem:[%s103] sm:$0xf] %v99
    %105 = vst [vmem:[%s103 + $0x4] sm:$0xf] %v100
    %v106 = vmul.f32 %v34, -0.484375
    %v107 = vmul.f32 %v35, -0.484375
    %v108 = vround.ne.pseudo %v106
    %v109 = vround.ne.pseudo %v107
    %v110 = vmax.f32 %v108, -128.0
    %v111 = vmax.f32 %v109, -128.0
    %v112 = vmin.f32 %v110, 127.0
    %v113 = vmin.f32 %v111, 127.0
    %v114 = vmul.f32 %v112, 0.015625
    %v115 = vmul.f32 %v113, 0.015625
    %v116 = vpack.c.bf16 %v115, %v114
    %v118 = vunpack.c.l.b16 %v116
    %v119 = vunpack.c.h.b16 %v116
    %v120 = vpack.c.b16 %v118, %v118
    %v121 = vpack.c.b16 %v119, %v119
    %s124 = scalar_lea.vmem [#allocation5], 24
    %125 = vst [vmem:[%s124] sm:$0xf] %v120
    %126 = vst [vmem:[%s124 + $0x4] sm:$0xf] %v121
    %v127 = vmul.f32 %v34, %v47
    %v128 = vmul.f32 %v35, %v48
    %v129 = vmul.f32 %v127, 0.015625
    %v130 = vmul.f32 %v128, 0.015625
    %v131 = vround.ne.pseudo %v129
    %v132 = vround.ne.pseudo %v130
    %v133 = vmax.f32 %v131, -128.0
    %v134 = vmax.f32 %v132, -128.0
    %v135 = vmin.f32 %v133, 127.0
    %v136 = vmin.f32 %v134, 127.0
    %v137 = vmul.f32 %v34, %v60
    %v138 = vmul.f32 %v35, %v61
    %v139 = vmul.f32 %v137, 0.015625
    %v140 = vmul.f32 %v138, 0.015625
    %v141 = vround.ne.pseudo %v139
    %v142 = vround.ne.pseudo %v140
    %v143 = vmax.f32 %v141, -128.0
    %v144 = vmax.f32 %v142, -128.0
    %v145 = vmin.f32 %v143, 127.0
    %v146 = vmin.f32 %v144, 127.0
    %v147 = vmul.f32 %v47, %v60
    %v148 = vmul.f32 %v48, %v61
    %v149 = vmul.f32 %v147, 0.015625
    %v150 = vmul.f32 %v148, 0.015625
    %v151 = vround.ne.pseudo %v149
    %v152 = vround.ne.pseudo %v150
    %v153 = vmax.f32 %v151, -128.0
    %v154 = vmax.f32 %v152, -128.0
    %v155 = vmin.f32 %v153, 127.0
    %v156 = vmin.f32 %v154, 127.0
    %v157 = vmul.f32 %v34, %v34
    %v158 = vmul.f32 %v35, %v35
    %v159 = vmul.f32 %v157, 0.015625
    %v160 = vmul.f32 %v158, 0.015625
    %v161 = vround.ne.pseudo %v159
    %v162 = vround.ne.pseudo %v160
    %v163 = vmax.f32 %v161, -128.0
    %v164 = vmax.f32 %v162, -128.0
    %v165 = vmin.f32 %v163, 127.0
    %v166 = vmin.f32 %v164, 127.0
    %v167 = vmul.f32 %v47, %v47
    %v168 = vmul.f32 %v48, %v48
    %v169 = vmul.f32 %v167, 0.015625
    %v170 = vmul.f32 %v168, 0.015625
    %v171 = vround.ne.pseudo %v169
    %v172 = vround.ne.pseudo %v170
    %v173 = vmax.f32 %v171, -128.0
    %v174 = vmax.f32 %v172, -128.0
    %v175 = vmin.f32 %v173, 127.0
    %v176 = vmin.f32 %v174, 127.0
    %v177 = vmul.f32 %v60, %v60
    %v178 = vmul.f32 %v61, %v61
    %v179 = vmul.f32 %v177, 0.015625
    %v180 = vmul.f32 %v178, 0.015625
    %v181 = vround.ne.pseudo %v179
    %v182 = vround.ne.pseudo %v180
    %v183 = vmax.f32 %v181, -128.0
    %v184 = vmax.f32 %v182, -128.0
    %v185 = vmin.f32 %v183, 127.0
    %v186 = vmin.f32 %v184, 127.0
    %v187 = vsub.f32 %v165, %v175
    %v188 = vsub.f32 %v166, %v176
    %v189 = vmul.f32 %v135, 1.09375
    %v190 = vmul.f32 %v136, 1.09375
    %v191 = vround.ne.pseudo %v189
    %v192 = vround.ne.pseudo %v190
    %v193 = vmax.f32 %v191, -128.0
    %v194 = vmax.f32 %v192, -128.0
    %v195 = vmin.f32 %v193, 127.0
    %v196 = vmin.f32 %v194, 127.0
    %v197 = vmul.f32 %v195, 0.015625
    %v198 = vmul.f32 %v196, 0.015625
    %v199 = vpack.c.bf16 %v198, %v197
    %v201 = vunpack.c.l.b16 %v199
    %v202 = vunpack.c.h.b16 %v199
    %v203 = vpack.c.b16 %v201, %v201
    %v204 = vpack.c.b16 %v202, %v202
    %s207 = scalar_lea.vmem [#allocation5], 32
    %208 = vst [vmem:[%s207] sm:$0xf] %v203
    %209 = vst [vmem:[%s207 + $0x4] sm:$0xf] %v204
    %v210 = vmul.f32 %v155, -1.09375
    %v211 = vmul.f32 %v156, -1.09375
    %v212 = vround.ne.pseudo %v210
    %v213 = vround.ne.pseudo %v211
    %v214 = vmax.f32 %v212, -128.0
    %v215 = vmax.f32 %v213, -128.0
    %v216 = vmin.f32 %v214, 127.0
    %v217 = vmin.f32 %v215, 127.0
    %v218 = vmul.f32 %v216, 0.015625
    %v219 = vmul.f32 %v217, 0.015625
    %v220 = vpack.c.bf16 %v219, %v218
    %v222 = vunpack.c.l.b16 %v220
    %v223 = vunpack.c.h.b16 %v220
    %v224 = vpack.c.b16 %v222, %v222
    %v225 = vpack.c.b16 %v223, %v223
    %s228 = scalar_lea.vmem [#allocation5], 40
    %229 = vst [vmem:[%s228] sm:$0xf] %v224
    %230 = vst [vmem:[%s228 + $0x4] sm:$0xf] %v225
    %v231 = vmul.f32 %v185, 0.953125
    %v232 = vmul.f32 %v186, 0.953125
    %v233 = vsub.f32 %v231, 20.0
    %v234 = vsub.f32 %v232, 20.0
    %v235 = vround.ne.pseudo %v233
    %v236 = vround.ne.pseudo %v234
    %v237 = vmax.f32 %v235, -128.0
    %v238 = vmax.f32 %v236, -128.0
    %v239 = vmin.f32 %v237, 127.0
    %v240 = vmin.f32 %v238, 127.0
    %v241 = vmul.f32 %v239, 0.015625
    %v242 = vmul.f32 %v240, 0.015625
    %v243 = vpack.c.bf16 %v242, %v241
    %v245 = vunpack.c.l.b16 %v243
    %v246 = vunpack.c.h.b16 %v243
    %v247 = vpack.c.b16 %v245, %v245
    %v248 = vpack.c.b16 %v246, %v246
    %s251 = scalar_lea.vmem [#allocation5], 48
    %252 = vst [vmem:[%s251] sm:$0xf] %v247
    %253 = vst [vmem:[%s251 + $0x4] sm:$0xf] %v248
    %v254 = vmul.f32 %v145, -1.09375
    %v255 = vmul.f32 %v146, -1.09375
    %v256 = vround.ne.pseudo %v254
    %v257 = vround.ne.pseudo %v255
    %v258 = vmax.f32 %v256, -128.0
    %v259 = vmax.f32 %v257, -128.0
    %v260 = vmin.f32 %v258, 127.0
    %v261 = vmin.f32 %v259, 127.0
    %v262 = vmul.f32 %v260, 0.015625
    %v263 = vmul.f32 %v261, 0.015625
    %v264 = vpack.c.bf16 %v263, %v262
    %v266 = vunpack.c.l.b16 %v264
    %v267 = vunpack.c.h.b16 %v264
    %v268 = vpack.c.b16 %v266, %v266
    %v269 = vpack.c.b16 %v267, %v267
    %s272 = scalar_lea.vmem [#allocation5], 56
    %273 = vst [vmem:[%s272] sm:$0xf] %v268
    %274 = vst [vmem:[%s272 + $0x4] sm:$0xf] %v269
    %v275 = vmul.f32 %v187, 0.546875
    %v276 = vmul.f32 %v188, 0.546875
    %v277 = vround.ne.pseudo %v275
    %v278 = vround.ne.pseudo %v276
    %v279 = vmax.f32 %v277, -128.0
    %v280 = vmax.f32 %v278, -128.0
    %v281 = vmin.f32 %v279, 127.0
    %v282 = vmin.f32 %v280, 127.0
    %v283 = vmul.f32 %v281, 0.015625
    %v284 = vmul.f32 %v282, 0.015625
    %v285 = vpack.c.bf16 %v284, %v283
    %v287 = vunpack.c.l.b16 %v285
    %v288 = vunpack.c.h.b16 %v285
    %v289 = vpack.c.b16 %v287, %v287
    %v290 = vpack.c.b16 %v288, %v288
    %s293 = scalar_lea.vmem [#allocation5], 64
    %294 = vst [vmem:[%s293] sm:$0xf] %v289
    %295 = vst [vmem:[%s293 + $0x4] sm:$0xf] %v290
    %v296 = vmul.f32 %v185, 5.0
    %v297 = vmul.f32 %v186, 5.0
    %v298 = vsub.f32 64.0, %v296
    %v299 = vsub.f32 64.0, %v297
    %v300 = vmax.f32 %v298, -128.0
    %v301 = vmax.f32 %v299, -128.0
    %v302 = vmin.f32 %v300, 127.0
    %v303 = vmin.f32 %v301, 127.0
    %v304 = vsub.f32 %v296, 192.0
    %v305 = vsub.f32 %v297, 192.0
    %v306 = vmax.f32 %v304, -128.0
    %v307 = vmax.f32 %v305, -128.0
    %v308 = vmin.f32 %v306, 127.0
    %v309 = vmin.f32 %v307, 127.0
    %v310 = vmul.f32 %v165, 3.0
    %v311 = vmul.f32 %v166, 3.0
    %v312 = vsub.f32 %v175, %v310
    %v313 = vsub.f32 %v176, %v311
    %v314 = vmax.f32 %v312, -128.0
    %v315 = vmax.f32 %v313, -128.0
    %v316 = vmin.f32 %v314, 127.0
    %v317 = vmin.f32 %v315, 127.0
    %v318 = vmul.f32 %v175, 3.0
    %v319 = vmul.f32 %v176, 3.0
    %v320 = vsub.f32 %v318, %v165
    %v321 = vsub.f32 %v319, %v166
    %v322 = vmax.f32 %v320, -128.0
    %v323 = vmax.f32 %v321, -128.0
    %v324 = vmin.f32 %v322, 127.0
    %v325 = vmin.f32 %v323, 127.0
    %v326 = vmax.f32 %v187, -128.0
    %v327 = vmax.f32 %v188, -128.0
    %v328 = vmin.f32 %v326, 127.0
    %v329 = vmin.f32 %v327, 127.0
    %v330 = vmul.f32 %v47, 0.009277344
    %v331 = vmul.f32 %v48, 0.009277344
    %v332 = vmul.f32 %v330, %v316
    %v333 = vmul.f32 %v331, %v317
    %v334 = vround.ne.pseudo %v332
    %v335 = vround.ne.pseudo %v333
    %v336 = vmax.f32 %v334, -128.0
    %v337 = vmax.f32 %v335, -128.0
    %v338 = vmin.f32 %v336, 127.0
    %v339 = vmin.f32 %v337, 127.0
    %v340 = vmul.f32 %v338, 0.015625
    %v341 = vmul.f32 %v339, 0.015625
    %v342 = vpack.c.bf16 %v341, %v340
    %v344 = vunpack.c.l.b16 %v342
    %v345 = vunpack.c.h.b16 %v342
    %v346 = vpack.c.b16 %v344, %v344
    %v347 = vpack.c.b16 %v345, %v345
    %s350 = scalar_lea.vmem [#allocation5], 72
    %351 = vst [vmem:[%s350] sm:$0xf] %v346
    %352 = vst [vmem:[%s350 + $0x4] sm:$0xf] %v347
    %v353 = vmul.f32 %v135, 0.03100586
    %v354 = vmul.f32 %v136, 0.03100586
    %v355 = vmul.f32 %v353, %v60
    %v356 = vmul.f32 %v354, %v61
    %v357 = vround.ne.pseudo %v355
    %v358 = vround.ne.pseudo %v356
    %v359 = vmax.f32 %v357, -128.0
    %v360 = vmax.f32 %v358, -128.0
    %v361 = vmin.f32 %v359, 127.0
    %v362 = vmin.f32 %v360, 127.0
    %v363 = vmul.f32 %v361, 0.015625
    %v364 = vmul.f32 %v362, 0.015625
    %v365 = vpack.c.bf16 %v364, %v363
    %v367 = vunpack.c.l.b16 %v365
    %v368 = vunpack.c.h.b16 %v365
    %v369 = vpack.c.b16 %v367, %v367
    %v370 = vpack.c.b16 %v368, %v368
    %s373 = scalar_lea.vmem [#allocation5], 80
    %374 = vst [vmem:[%s373] sm:$0xf] %v369
    %375 = vst [vmem:[%s373 + $0x4] sm:$0xf] %v370
    %v376 = vmul.f32 %v47, 0.007080078
    %v377 = vmul.f32 %v48, 0.007080078
    %v378 = vmul.f32 %v376, %v302
    %v379 = vmul.f32 %v377, %v303
    %v380 = vround.ne.pseudo %v378
    %v381 = vround.ne.pseudo %v379
    %v382 = vmax.f32 %v380, -128.0
    %v383 = vmax.f32 %v381, -128.0
    %v384 = vmin.f32 %v382, 127.0
    %v385 = vmin.f32 %v383, 127.0
    %v386 = vmul.f32 %v384, 0.015625
    %v387 = vmul.f32 %v385, 0.015625
    %v388 = vpack.c.bf16 %v387, %v386
    %v390 = vunpack.c.l.b16 %v388
    %v391 = vunpack.c.h.b16 %v388
    %v392 = vpack.c.b16 %v390, %v390
    %v393 = vpack.c.b16 %v391, %v391
    %s396 = scalar_lea.vmem [#allocation5], 88
    %397 = vst [vmem:[%s396] sm:$0xf] %v392
    %398 = vst [vmem:[%s396 + $0x4] sm:$0xf] %v393
    %v399 = vmul.f32 %v60, 0.005859375
    %v400 = vmul.f32 %v61, 0.005859375
    %v401 = vmul.f32 %v399, %v308
    %v402 = vmul.f32 %v400, %v309
    %v403 = vround.ne.pseudo %v401
    %v404 = vround.ne.pseudo %v402
    %v405 = vmax.f32 %v403, -128.0
    %v406 = vmax.f32 %v404, -128.0
    %v407 = vmin.f32 %v405, 127.0
    %v408 = vmin.f32 %v406, 127.0
    %v409 = vmul.f32 %v407, 0.015625
    %v410 = vmul.f32 %v408, 0.015625
    %v411 = vpack.c.bf16 %v410, %v409
    %v413 = vunpack.c.l.b16 %v411
    %v414 = vunpack.c.h.b16 %v411
    %v415 = vpack.c.b16 %v413, %v413
    %v416 = vpack.c.b16 %v414, %v414
    %s419 = scalar_lea.vmem [#allocation5], 96
    %420 = vst [vmem:[%s419] sm:$0xf] %v415
    %421 = vst [vmem:[%s419 + $0x4] sm:$0xf] %v416
    %v422 = vmul.f32 %v34, 0.007080078
    %v423 = vmul.f32 %v35, 0.007080078
    %v424 = vmul.f32 %v422, %v302
    %v425 = vmul.f32 %v423, %v303
    %v426 = vround.ne.pseudo %v424
    %v427 = vround.ne.pseudo %v425
    %v428 = vmax.f32 %v426, -128.0
    %v429 = vmax.f32 %v427, -128.0
    %v430 = vmin.f32 %v428, 127.0
    %v431 = vmin.f32 %v429, 127.0
    %v432 = vmul.f32 %v430, 0.015625
    %v433 = vmul.f32 %v431, 0.015625
    %v434 = vpack.c.bf16 %v433, %v432
    %v436 = vunpack.c.l.b16 %v434
    %v437 = vunpack.c.h.b16 %v434
    %v438 = vpack.c.b16 %v436, %v436
    %v439 = vpack.c.b16 %v437, %v437
    %s442 = scalar_lea.vmem [#allocation5], 104
    %443 = vst [vmem:[%s442] sm:$0xf] %v438
    %444 = vst [vmem:[%s442 + $0x4] sm:$0xf] %v439
    %v445 = vmul.f32 %v60, 0.022460938
    %v446 = vmul.f32 %v61, 0.022460938
    %v447 = vmul.f32 %v445, %v328
    %v448 = vmul.f32 %v446, %v329
    %v449 = vround.ne.pseudo %v447
    %v450 = vround.ne.pseudo %v448
    %v451 = vmax.f32 %v449, -128.0
    %v452 = vmax.f32 %v450, -128.0
    %v453 = vmin.f32 %v451, 127.0
    %v454 = vmin.f32 %v452, 127.0
    %v455 = vmul.f32 %v453, 0.015625
    %v456 = vmul.f32 %v454, 0.015625
    %v457 = vpack.c.bf16 %v456, %v455
    %v459 = vunpack.c.l.b16 %v457
    %v460 = vunpack.c.h.b16 %v457
    %v461 = vpack.c.b16 %v459, %v459
    %v462 = vpack.c.b16 %v460, %v460
    %s465 = scalar_lea.vmem [#allocation5], 112
    %466 = vst [vmem:[%s465] sm:$0xf] %v461
    %467 = vst [vmem:[%s465 + $0x4] sm:$0xf] %v462
    %v468 = vmul.f32 %v34, 0.009277344
    %v469 = vmul.f32 %v35, 0.009277344
    %v470 = vmul.f32 %v468, %v324
    %v471 = vmul.f32 %v469, %v325
    %v472 = vround.ne.pseudo %v470
    %v473 = vround.ne.pseudo %v471
    %v474 = vmax.f32 %v472, -128.0
    %v475 = vmax.f32 %v473, -128.0
    %v476 = vmin.f32 %v474, 127.0
    %v477 = vmin.f32 %v475, 127.0
    %v478 = vmul.f32 %v476, 0.015625
    %v479 = vmul.f32 %v477, 0.015625
    %v480 = vpack.c.bf16 %v479, %v478
    %v482 = vunpack.c.l.b16 %v480
    %v483 = vunpack.c.h.b16 %v480
    %v484 = vpack.c.b16 %v482, %v482
    %v485 = vpack.c.b16 %v483, %v483
    %s488 = scalar_lea.vmem [#allocation5], 120
    %489 = vst [vmem:[%s488] sm:$0xf] %v484
    %490 = vst [vmem:[%s488 + $0x4] sm:$0xf] %v485
    // Predicated region
    $region10: #{tpu_custom_call.1} parent=1 // pred_check
      _
    $region11: #{tpu_custom_call.1} parent=1 // pred_check_branch
      %492 = sbr.rel (0) target = $region13
    $region12: #{tpu_custom_call.1} parent=1 // pred_region
      %s494 = ssub.s32 2048, 2048
      %495 = vsyncadd [#allocation4], %s494
      %s496 = sshll.u32 [#allocation5], 4
      %s497 = int_to_ptr.vmem [resolvable:$true] %s496
      %502 = dma.vmem_to_hbm [thread:$0]  %s497, 2048, %s1, [#allocation4], 64, 64, 4
    $region13: #{tpu_custom_call.1} parent=1 // pred_fallthru
      _
    // Predicated region
    $region14: #{tpu_custom_call.1} parent=1 // pred_check
      _
    $region15: #{tpu_custom_call.1} parent=1 // pred_check_branch
      %504 = sbr.rel (0) target = $region17
    $region16: #{tpu_custom_call.1} parent=1 // pred_region
      %505 = dma.done [#allocation4], 2048
    $region17: #{tpu_custom_call.1} parent=1 // pred_fallthru
      _
    %506 = vsyncpa [#allocation3], 1
    %507 = vsyncpa [#allocation4], 1

</llo_original>
